<compile_context>
chip_gen: v5e
topology: v5e:2x2
jax: 0.10.0
libtpu: 0.0.40
codegen_flags: <defaults>
</compile_context>

<pallas_src>
import jax
import jax.numpy as jnp
from jax.experimental import pallas as pl
from jax.experimental.pallas import tpu as pltpu


_LANE = 128            # lane width: pad the hidden (output) dim to this
_SUBLANE = 8           # sublane granularity for the sequence (row) dim
_VMEM_LIMIT = 32 * 1024 * 1024
_VMEM_BUDGET = 20 * 1024 * 1024   # headroom under the scoped limit


def _round_up(n, m):
    return ((n + m - 1) // m) * m


def _choose_seq_tile(t, d, hp):
    """Largest row tile TT (multiple of 8) whose double-buffered working set
    (x-tile, weight, add-tile, out-tile) fits the VMEM budget; Tp % TT == 0."""
    def wset(tt):  # f32, 2x for double buffering
        return 8 * (tt * d + d * hp + 2 * tt * hp)

    t8 = _round_up(t, _SUBLANE)
    if t8 <= 1024 and wset(t8) <= _VMEM_BUDGET:
        return t8, t8                              # single tile per (g, b)
    for tt in (1024, 512, 256, 128, 64, 32, 16, 8):
        if tt <= t8 and wset(tt) <= _VMEM_BUDGET:
            return tt, _round_up(t, tt)
    return _SUBLANE, _round_up(t, _SUBLANE)


# ---------------------------------------------------------------------------
# Kernel: grouped (linear + additive) projection.
# ---------------------------------------------------------------------------

def _grouped_linear_add_kernel(x_ref, w_ref, add_ref, o_ref):
    """o[g, b, tile] = x[g, b, tile] @ W[g] + add[g, tile]

    x_ref  : (1, 1, TT, D)    one (group, seq-tile, batch) block
    w_ref  : (1, D, Hp)       weight for this group (in x out layout)
    add_ref: (1, TT, Hp)      pre-folded bias + positional embedding
    o_ref  : (1, 1, TT, Hp)
    """
    y = jnp.dot(x_ref[0, 0], w_ref[0], preferred_element_type=jnp.float32)
    o_ref[0, 0] = (y + add_ref[0]).astype(o_ref.dtype)


def grouped_linear_add(x, w, add, *, seq_tile, out_dtype=jnp.float32):
    """x: (G, B, Tp, D), w: (G, D, Hp), add: (G, Tp, Hp) -> (G, B, Tp, Hp).

    Caller guarantees: Tp % seq_tile == 0, seq_tile % 8 == 0, Hp % 128 == 0
    (or Hp == full hidden dim).
    """
    G, B, Tp, D = x.shape
    Hp = w.shape[-1]
    assert Tp % seq_tile == 0
    nT = Tp // seq_tile
    TT = seq_tile

    flops = 2 * G * B * Tp * D * Hp
    bytes_accessed = 4 * (int(x.size) + int(w.size) + int(add.size)
                          + G * B * Tp * Hp)

    return pl.pallas_call(
        _grouped_linear_add_kernel,
        out_shape=jax.ShapeDtypeStruct((G, B, Tp, Hp), out_dtype),
        grid_spec=pltpu.PrefetchScalarGridSpec(
            num_scalar_prefetch=0,
            # g outermost (weight resident per group), b innermost (add
            # resident across the batch), only x / out move every step.
            grid=(G, nT, B),
            in_specs=[
                pl.BlockSpec((1, 1, TT, D), lambda g, t, b: (g, b, t, 0)),
                pl.BlockSpec((1, D, Hp),    lambda g, t, b: (g, 0, 0)),
                pl.BlockSpec((1, TT, Hp),   lambda g, t, b: (g, t, 0)),
            ],
            out_specs=pl.BlockSpec((1, 1, TT, Hp),
                                   lambda g, t, b: (g, b, t, 0)),
        ),
        compiler_params=pltpu.CompilerParams(
            dimension_semantics=("parallel", "parallel", "parallel"),
            vmem_limit_bytes=_VMEM_LIMIT),
        cost_estimate=pl.CostEstimate(
            flops=flops, transcendentals=0, bytes_accessed=bytes_accessed),
    )(x, w, add)


# ---------------------------------------------------------------------------
# Parameter construction (deterministic, mirrors Embeddings.__init__ shapes).
# ---------------------------------------------------------------------------

OMICS_KEYS = ("rna_seq", "mirna_seq", "copynumbervariation",
              "dnamethylationvariation", "snp")


def init_params(key, *, wsi_dim, omics_dim, hidden_size,
                wsi_feature_len, omics_feature_len):
    ks = iter(jax.random.split(key, 32))

    def linear(din, dout):
        bound = 1.0 / jnp.sqrt(din)
        w = jax.random.uniform(next(ks), (din, dout), jnp.float32, -bound, bound)
        b = jax.random.uniform(next(ks), (dout,), jnp.float32, -bound, bound)
        return w, b

    params = {}
    params["patch_w"], params["patch_b"] = linear(wsi_dim, hidden_size)
    for omic in OMICS_KEYS:
        params[f"{omic}_w"], params[f"{omic}_b"] = linear(omics_dim, hidden_size)
        # nn.Parameter(torch.zeros(...)) in the module; small random values
        # here so the positional add is actually exercised.
        params[f"pe_{omic}"] = 0.02 * jax.random.normal(
            next(ks), (1, omics_feature_len[omic], hidden_size), jnp.float32)
    params["position_embeddings"] = 0.02 * jax.random.normal(
        next(ks), (1, 1 + wsi_feature_len, hidden_size), jnp.float32)
    params["cls_token"] = 0.02 * jax.random.normal(
        next(ks), (1, 1, hidden_size), jnp.float32)
    return params


# ---------------------------------------------------------------------------
# Forward pass (matches Embeddings.forward, dropout = identity / eval mode).
# ---------------------------------------------------------------------------

def embeddings_forward(params, x, omics_inputs_dict):
    B, L, d_wsi = x.shape
    H = params["cls_token"].shape[-1]
    Hp = _round_up(H, _LANE)

    # ---------------- WSI path (one pallas_call, G = 1) ----------------
    # Sequence row 0 is the cls token: feed a zero input row there and fold
    # (cls_token + pos[0]) into the additive tensor; rows 1..L get pos + bias.
    # The kernel thus writes the final (B, 1+L, H) layout in one pass.
    T = 1 + L
    TT, Tp = _choose_seq_tile(T, d_wsi, Hp)

    x_full = jnp.pad(x, ((0, 0), (1, Tp - T), (0, 0)))[None]        # (1,B,Tp,D)
    w_wsi = jnp.pad(params["patch_w"], ((0, 0), (0, Hp - H)))[None]  # (1,D,Hp)

    pos = params["position_embeddings"][0]                           # (1+L, H)
    add_wsi = jnp.concatenate(
        [params["cls_token"][0] + pos[:1],                           # cls row
         pos[1:T] + params["patch_b"]], axis=0)                      # (T, H)
    add_wsi = jnp.pad(add_wsi, ((0, Tp - T), (0, Hp - H)))[None]     # (1,Tp,Hp)

    wsi_out = grouped_linear_add(x_full, w_wsi, add_wsi, seq_tile=TT)
    embeddings = wsi_out[0, :, :T, :H]
    # TODO(synk): dropout omitted (inference / eval mode -> identity).

    # ---------------- omics path: 5 projections fused in ONE call -------
    keys = list(omics_inputs_dict.keys())
    G = len(keys)
    lens = {k: omics_inputs_dict[k].shape[1] for k in keys}
    d_om = omics_inputs_dict[keys[0]].shape[2]
    TTo, Tpo = _choose_seq_tile(max(lens.values()), d_om, Hp)

    x_om = jnp.stack([
        jnp.pad(omics_inputs_dict[k], ((0, 0), (0, Tpo - lens[k]), (0, 0)))
        for k in keys])                                              # (G,B,Tpo,D)
    w_om = jnp.stack([
        jnp.pad(params[f"{k}_w"], ((0, 0), (0, Hp - H))) for k in keys])
    add_om = jnp.stack([
        jnp.pad(params[f"pe_{k}"][0] + params[f"{k}_b"],
                ((0, Tpo - lens[k]), (0, Hp - H))) for k in keys])    # (G,Tpo,Hp)

    om_out = grouped_linear_add(x_om, w_om, add_om, seq_tile=TTo)    # (G,B,Tpo,Hp)
    omics_embeddings = {k: om_out[g, :, :lens[k], :H]
                        for g, k in enumerate(keys)}
    # TODO(synk): per-omic dropout omitted (inference mode -> identity).

    return embeddings, omics_embeddings


# ---------------------------------------------------------------------------

if __name__ == "__main__":
    # Small, forward-consistent config.
    B = 2
    WSI_DIM = 16
    OMICS_DIM = 16
    HIDDEN = 32
    WSI_LEN = 8
    OMICS_LEN = {"rna_seq": 4, "mirna_seq": 4, "copynumbervariation": 4,
                 "dnamethylationvariation": 4, "snp": 4}

    key = jax.random.PRNGKey(0)
    kp, kx, *kom = jax.random.split(key, 2 + len(OMICS_KEYS))

    params = init_params(kp, wsi_dim=WSI_DIM, omics_dim=OMICS_DIM,
                         hidden_size=HIDDEN, wsi_feature_len=WSI_LEN,
                         omics_feature_len=OMICS_LEN)

    x = jax.random.normal(kx, (B, WSI_LEN, WSI_DIM), jnp.float32)
    omics_inputs = {
        omic: jax.random.normal(kom[i], (B, OMICS_LEN[omic], OMICS_DIM),
                                jnp.float32)
        for i, omic in enumerate(OMICS_KEYS)
    }

    embeddings, omics_embeddings = embeddings_forward(params, x, omics_inputs)
    jax.block_until_ready(embeddings)
    for v in omics_embeddings.values():
        jax.block_until_ready(v)

    # Reference check in plain JAX (same math as the PyTorch forward).
    ref_wsi = jnp.einsum("bld,dh->blh", x, params["patch_w"]) + params["patch_b"]
    ref_cls = jnp.broadcast_to(params["cls_token"], (B, 1, HIDDEN))
    ref_emb = (jnp.concatenate([ref_cls, ref_wsi], axis=1)
               + params["position_embeddings"])
    assert embeddings.shape == (B, 1 + WSI_LEN, HIDDEN)
    assert jnp.allclose(embeddings, ref_emb, atol=1e-5), "wsi embeddings mismatch"
    for omic in OMICS_KEYS:
        ref_o = (jnp.einsum("bld,dh->blh", omics_inputs[omic],
                            params[f"{omic}_w"])
                 + params[f"{omic}_b"] + params[f"pe_{omic}"])
        assert omics_embeddings[omic].shape == (B, OMICS_LEN[omic], HIDDEN)
        assert jnp.allclose(omics_embeddings[omic], ref_o, atol=1e-5), omic

    print("KERNEL_OK")
</pallas_src>

<mosaic_0001>
module attributes {stable_mosaic.version = 11 : i64} {
  func.func @_grouped_linear_add_kernel(%arg0: i32, %arg1: i32, %arg2: i32, %arg3: memref<1x1x16x16xf32, #tpu.memory_space<vmem>>, %arg4: memref<1x16x128xf32, #tpu.memory_space<vmem>>, %arg5: memref<1x16x128xf32, #tpu.memory_space<vmem>>, %arg6: memref<1x1x16x128xf32, #tpu.memory_space<vmem>>) attributes {dimension_semantics = [#tpu.dimension_semantics<parallel>, #tpu.dimension_semantics<parallel>, #tpu.dimension_semantics<parallel>], iteration_bounds = array<i64: 1, 1, 2>, scalar_prefetch = 0 : i64, scratch_operands = 0 : i64, tpu.core_type = #tpu.core_type<tc>, window_params = [{transform_indices = @transform_0, window_bounds = array<i64: 1, 1, 16, 16>}, {transform_indices = @transform_1, window_bounds = array<i64: 1, 16, 128>}, {transform_indices = @transform_2, window_bounds = array<i64: 1, 16, 128>}, {transform_indices = @transform_3, window_bounds = array<i64: 1, 1, 16, 128>}]} {
    %c0 = arith.constant 0 : index
    %c0_0 = arith.constant 0 : index
    %c0_1 = arith.constant 0 : index
    %c0_2 = arith.constant 0 : index
    %0 = vector.load %arg3[%c0, %c0_0, %c0_1, %c0_2] : memref<1x1x16x16xf32, #tpu.memory_space<vmem>>, vector<1x1x16x16xf32>
    %1 = vector.shape_cast %0 : vector<1x1x16x16xf32> to vector<16x16xf32>
    %c0_3 = arith.constant 0 : index
    %c0_4 = arith.constant 0 : index
    %c0_5 = arith.constant 0 : index
    %2 = vector.load %arg4[%c0_3, %c0_4, %c0_5] : memref<1x16x128xf32, #tpu.memory_space<vmem>>, vector<1x16x128xf32>
    %3 = vector.shape_cast %2 : vector<1x16x128xf32> to vector<16x128xf32>
    %cst = arith.constant dense<0.000000e+00> : vector<16x128xf32>
    %4 = tpu.matmul %1, %3, %cst {dimension_numbers = #tpu.dot_dimension_numbers<[1], [0], [0], [1], [0, 0, 1, 1], [], []>} : vector<16x16xf32>, vector<16x128xf32>, vector<16x128xf32> -> vector<16x128xf32>
    %c0_6 = arith.constant 0 : index
    %c0_7 = arith.constant 0 : index
    %c0_8 = arith.constant 0 : index
    %5 = vector.load %arg5[%c0_6, %c0_7, %c0_8] : memref<1x16x128xf32, #tpu.memory_space<vmem>>, vector<1x16x128xf32>
    %6 = vector.shape_cast %5 : vector<1x16x128xf32> to vector<16x128xf32>
    %7 = arith.addf %4, %6 : vector<16x128xf32>
    %c0_9 = arith.constant 0 : index
    %c0_10 = arith.constant 0 : index
    %c0_11 = arith.constant 0 : index
    %c0_12 = arith.constant 0 : index
    %8 = vector.load %arg6[%c0_9, %c0_10, %c0_11, %c0_12] : memref<1x1x16x128xf32, #tpu.memory_space<vmem>>, vector<1x1x16x128xf32>
    %9 = vector.shape_cast %8 : vector<1x1x16x128xf32> to vector<16x128xf32>
    %10 = vector.shape_cast %7 : vector<16x128xf32> to vector<1x1x16x128xf32>
    tpu.vector_store %arg6[%c0_9, %c0_10, %c0_11, %c0_12], %10 {strides = array<i32>} : memref<1x1x16x128xf32, #tpu.memory_space<vmem>>, vector<1x1x16x128xf32>,
    return
  }
  func.func @transform_0(%arg0: i32, %arg1: i32, %arg2: i32) -> (i32, i32, i32, i32) {
    %c0_i32 = arith.constant 0 : i32
    %c0_i32_0 = arith.constant 0 : i32
    return %arg0, %arg2, %arg1, %c0_i32 : i32, i32, i32, i32
  }
  func.func @transform_1(%arg0: i32, %arg1: i32, %arg2: i32) -> (i32, i32, i32) {
    %c0_i32 = arith.constant 0 : i32
    %c0_i32_0 = arith.constant 0 : i32
    %c0_i32_1 = arith.constant 0 : i32
    return %arg0, %c0_i32, %c0_i32_0 : i32, i32, i32
  }
  func.func @transform_2(%arg0: i32, %arg1: i32, %arg2: i32) -> (i32, i32, i32) {
    %c0_i32 = arith.constant 0 : i32
    %c0_i32_0 = arith.constant 0 : i32
    return %arg0, %arg1, %c0_i32 : i32, i32, i32
  }
  func.func @transform_3(%arg0: i32, %arg1: i32, %arg2: i32) -> (i32, i32, i32, i32) {
    %c0_i32 = arith.constant 0 : i32
    %c0_i32_0 = arith.constant 0 : i32
    return %arg0, %arg2, %arg1, %c0_i32 : i32, i32, i32, i32
  }
}

</mosaic_0001>

<llo_original>
// kernel: tpu_custom_call.1
$region0: #{tpu_custom_call.1}
  #allocation0 [shape = 'u32[]', space=smem, size = 0x4, offset = 0x4, fixed_abs, tag = 'smem constant byte address 0x4 - core index']
  #allocation1 [shape = 'u32[72,128]{1,0:T(1,128)}', space=vmem, size = 0x9000, scoped, tag = 'internal scratch']
  %s0 = inlined_call_operand.hbm [shape: f32[1,2,16,16], index: 0, kind: input, shape index: {}]
  %s1 = inlined_call_operand.hbm [shape: f32[1,16,128], index: 1, kind: input, shape index: {}]
  %s2 = inlined_call_operand.hbm [shape: f32[1,16,128], index: 2, kind: input, shape index: {}]
  %s3 = inlined_call_operand.hbm [shape: f32[1,2,16,128], index: 3, kind: output, shape index: {}]
  %s4 = sld [smem:[#allocation0]]
  $region57: #{tpu_custom_call.1} parent=0
    _
  %s6 = ssub.s32 1, %s4
  %s7 = scalar_select 0, %s6, %s4
  $region1: #{tpu_custom_call.1} parent=0
    #allocation2 [shape = 'u8[16384]{0}', space=vmem, size = 0x4000, scoped, tag = 'input window, operand 0']
    #allocation3 [shape = 's32[2]{0}', space=sflag, size = 0x8, scoped, tag = 'scoped memory for tpu_custom_call.1']
    #allocation4 [shape = 's32[2]{0}', space=sflag, size = 0x8, scoped, tag = 'scoped memory for tpu_custom_call.1']
    #allocation5 [shape = 'u8[8192]{0}', space=vmem, size = 0x2000, scoped, tag = 'input window, operand 1, single buffered']
    #allocation6 [shape = 's32[1]{0}', space=sflag, size = 0x4, scoped, tag = 'scoped memory for tpu_custom_call.1']
    #allocation7 [shape = 'u8[8192]{0}', space=vmem, size = 0x2000, scoped, tag = 'input window, operand 2, single buffered']
    #allocation8 [shape = 'u8[16384]{0}', space=vmem, size = 0x4000, scoped, tag = 'output window, operand 0']
    %8 = vsyncpa [#allocation3], 0
    %s9 = scalar_lea.sflag [#allocation3], 1
    %10 = vsyncpa %s9, 0
    %11 = vsyncpa [#allocation6], 0
    %12 = vsyncpa [#allocation4], 0
    %s13 = scalar_lea.sflag [#allocation4], 1
    %14 = vsyncpa %s13, 0
    loop: start=0, step=1, limit=4
    $region2: #{tpu_custom_call.1} parent=1 // loop_pre_header
      _
    $region3: #{tpu_custom_call.1} parent=1 // loop_header
      %s16 = sphi 0, %s20
      %p17 = scmp.ge.s32.totalorder %s16, 4
      %s23 = sphi 0, %s42
      %s24 = sphi 0, %s38
      %s25 = sphi 0, %s34
      %s26 = sphi 0, %s23
      %s27 = sphi 0, %s24
      %s28 = sphi 0, %s25
      %s29 = sphi 0, %s26
      %s30 = sphi 0, %s27
      %s31 = sphi 0, %s28
      %s49 = sphi 0, %s51
      %s52 = sphi 0, %s49
      %s53 = sphi 0, %s52
      %s69 = sphi 0, %s53
      %s75 = sphi 0, %s77
      %s78 = sphi 0, %s75
      %s79 = sphi 0, %s78
      %s95 = sphi 0, %s79
      %s103 = sphi 0, %s105
      %s106 = sphi 0, %s103
      %s107 = sphi 0, %s106
      %s123 = sphi 0, %s107
      %s133 = sphi 0, %s135
      %s136 = sphi 0, %s133
      %s137 = sphi 0, %s136
      %s153 = sphi 0, %s137
    $region4: #{tpu_custom_call.1} parent=1 // loop_header_branch
      %19 = sbr.rel (%p17) target = $region8
    $region5: #{tpu_custom_call.1} parent=1 // loop_body
      %s21 = ssub.s32 %s16, 1
      %s22 = ssub.s32 %s16, 2
      %s32 = sadd.s32 1, %s25
      %p33 = scmp.ge.s32.totalorder %s32, 2
      %s34 = scalar_select %p33, 0, %s32
      %s35 = sadd.s32 1, %s24
      %s36 = scalar_select %p33, %s35, %s24
      %p37 = scmp.ge.s32.totalorder %s36, 1
      %s38 = scalar_select %p37, 0, %s36
      %s39 = sadd.s32 1, %s23
      %s40 = scalar_select %p37, %s39, %s23
      %p41 = scmp.ge.s32.totalorder %s40, 1
      %s42 = scalar_select %p41, 0, %s40
      %s43 = ssub.s32 %s23, %s42
      %s44 = ssub.s32 %s25, %s34
      %s45 = sor.u32 %s43, %s44
      %s46 = ssub.s32 %s24, %s38
      %s47 = sor.u32 %s45, %s46
      %p48 = scmp.eq.s32.totalorder %s47, 0
      %s50 = sadd.s32 %s49, 1
      %s51 = scalar_select %p48, %s49, %s50
      %p54 = pneg %p48
      %p55 = scmp.eq.s32.totalorder %s16, 1
      %p56 = por %p54, %p55
      %p57 = scmp.ne.s32.totalorder %s49, %s52
      %p58 = scmp.eq.s32.totalorder %s16, 0
      %p59 = por %p57, %p58
      %p60 = scmp.ne.s32.totalorder %s49, %s52
      %p61 = scmp.eq.s32.totalorder %s21, 1
      %p62 = por %p60, %p61
      %p63 = scmp.ne.s32.totalorder %s52, %s53
      %p64 = scmp.eq.s32.totalorder %s21, 0
      %p65 = por %p63, %p64
      %p66 = scmp.ne.s32.totalorder %s52, %s53
      %p67 = scmp.eq.s32.totalorder %s22, 1
      %p68 = por %p66, %p67
      %p70 = scmp.ne.s32.totalorder %s53, %s69
      %p71 = scmp.eq.s32.totalorder %s22, 0
      %p72 = por %p70, %p71
      %s73 = ssub.s32 %s23, %s42
      %p74 = scmp.eq.s32.totalorder %s73, 0
      %s76 = sadd.s32 %s75, 1
      %s77 = scalar_select %p74, %s75, %s76
      %p80 = pneg %p74
      %p81 = scmp.eq.s32.totalorder %s16, 1
      %p82 = por %p80, %p81
      %p83 = scmp.ne.s32.totalorder %s75, %s78
      %p84 = scmp.eq.s32.totalorder %s16, 0
      %p85 = por %p83, %p84
      %p86 = scmp.ne.s32.totalorder %s75, %s78
      %p87 = scmp.eq.s32.totalorder %s21, 1
      %p88 = por %p86, %p87
      %p89 = scmp.ne.s32.totalorder %s78, %s79
      %p90 = scmp.eq.s32.totalorder %s21, 0
      %p91 = por %p89, %p90
      %p92 = scmp.ne.s32.totalorder %s78, %s79
      %p93 = scmp.eq.s32.totalorder %s22, 1
      %p94 = por %p92, %p93
      %p96 = scmp.ne.s32.totalorder %s79, %s95
      %p97 = scmp.eq.s32.totalorder %s22, 0
      %p98 = por %p96, %p97
      %s99 = ssub.s32 %s23, %s42
      %s100 = ssub.s32 %s24, %s38
      %s101 = sor.u32 %s99, %s100
      %p102 = scmp.eq.s32.totalorder %s101, 0
      %s104 = sadd.s32 %s103, 1
      %s105 = scalar_select %p102, %s103, %s104
      %p108 = pneg %p102
      %p109 = scmp.eq.s32.totalorder %s16, 1
      %p110 = por %p108, %p109
      %p111 = scmp.ne.s32.totalorder %s103, %s106
      %p112 = scmp.eq.s32.totalorder %s16, 0
      %p113 = por %p111, %p112
      %p114 = scmp.ne.s32.totalorder %s103, %s106
      %p115 = scmp.eq.s32.totalorder %s21, 1
      %p116 = por %p114, %p115
      %p117 = scmp.ne.s32.totalorder %s106, %s107
      %p118 = scmp.eq.s32.totalorder %s21, 0
      %p119 = por %p117, %p118
      %p120 = scmp.ne.s32.totalorder %s106, %s107
      %p121 = scmp.eq.s32.totalorder %s22, 1
      %p122 = por %p120, %p121
      %p124 = scmp.ne.s32.totalorder %s107, %s123
      %p125 = scmp.eq.s32.totalorder %s22, 0
      %p126 = por %p124, %p125
      %s127 = ssub.s32 %s23, %s42
      %s128 = ssub.s32 %s25, %s34
      %s129 = sor.u32 %s127, %s128
      %s130 = ssub.s32 %s24, %s38
      %s131 = sor.u32 %s129, %s130
      %p132 = scmp.eq.s32.totalorder %s131, 0
      %s134 = sadd.s32 %s133, 1
      %s135 = scalar_select %p132, %s133, %s134
      %p138 = pneg %p132
      %p139 = scmp.eq.s32.totalorder %s16, 1
      %p140 = por %p138, %p139
      %p141 = scmp.ne.s32.totalorder %s133, %s136
      %p142 = scmp.eq.s32.totalorder %s16, 0
      %p143 = por %p141, %p142
      %p144 = scmp.ne.s32.totalorder %s133, %s136
      %p145 = scmp.eq.s32.totalorder %s21, 1
      %p146 = por %p144, %p145
      %p147 = scmp.ne.s32.totalorder %s136, %s137
      %p148 = scmp.eq.s32.totalorder %s21, 0
      %p149 = por %p147, %p148
      %p150 = scmp.ne.s32.totalorder %s136, %s137
      %p151 = scmp.eq.s32.totalorder %s22, 1
      %p152 = por %p150, %p151
      %p154 = scmp.ne.s32.totalorder %s137, %s153
      %p155 = scmp.eq.s32.totalorder %s22, 0
      %p156 = por %p154, %p155
      %p157 = scmp.le.s32.totalorder 1, %s16
      %p158 = scmp.lt.s32.totalorder %s16, 3
      %p159 = pnand %p157, %p158
      %p160 = pneg %p159
      // Predicated region
      $region9: #{tpu_custom_call.1} parent=5 // pred_check
        _
      $region10: #{tpu_custom_call.1} parent=5 // pred_check_branch
        %162 = sbr.rel (%p159) target = $region12
      $region11: #{tpu_custom_call.1} parent=5 // pred_region
        %s163 = ssub.s32 %s16, 1
        // Predicated region
        $region13: #{tpu_custom_call.1} parent=11 // pred_check
          %p164 = pneg %p91
        $region14: #{tpu_custom_call.1} parent=11 // pred_check_branch
          %166 = sbr.rel (%p164) target = $region16
        $region15: #{tpu_custom_call.1} parent=11 // pred_region
          %168 = vsyncadd [#allocation6], 0
          %s169 = smul.addr %s26, 2
          %s170 = smul.addr %s169, 8
          %s171 = scalar_lea.hbm %s1, %s170
          %s172 = sshll.u32 %s171, 4
          %s173 = int_to_ptr.hbm [resolvable:$true] %s172
          %s174 = sshll.u32 [#allocation5], 4
          %s175 = int_to_ptr.vmem [resolvable:$true] %s174
          %180 = dma.hbm_to_vmem [thread:$0]  %s173, 256, %s175, [#allocation6], 128, 128, 8
        $region16: #{tpu_custom_call.1} parent=11 // pred_fallthru
          _
        // Predicated region
        $region17: #{tpu_custom_call.1} parent=11 // pred_check
          %p181 = pneg %p119
        $region18: #{tpu_custom_call.1} parent=11 // pred_check_branch
          %183 = sbr.rel (%p181) target = $region20
        $region19: #{tpu_custom_call.1} parent=11 // pred_region
          %s184 = smul.u32 2, %s27
          %186 = vsyncadd [#allocation6], 0
          %s187 = smul.addr %s26, 2
          %s188 = sadd.s32 %s184, %s187
          %s189 = smul.addr %s188, 8
          %s190 = scalar_lea.hbm %s2, %s189
          %s191 = sshll.u32 %s190, 4
          %s192 = int_to_ptr.hbm [resolvable:$true] %s191
          %s193 = sshll.u32 [#allocation7], 4
          %s194 = int_to_ptr.vmem [resolvable:$true] %s193
          %199 = dma.hbm_to_vmem [thread:$0]  %s192, 256, %s194, [#allocation6], 128, 128, 8
        $region20: #{tpu_custom_call.1} parent=11 // pred_fallthru
          _
      $region12: #{tpu_custom_call.1} parent=5 // pred_fallthru
        _
      %p200 = scmp.lt.s32.totalorder %s16, 2
      // Predicated region
      $region21: #{tpu_custom_call.1} parent=5 // pred_check
        %p201 = pneg %p200
      $region22: #{tpu_custom_call.1} parent=5 // pred_check_branch
        %203 = sbr.rel (%p201) target = $region24
      $region23: #{tpu_custom_call.1} parent=5 // pred_region
        // Predicated region
        $region25: #{tpu_custom_call.1} parent=23 // pred_check
          %p204 = pneg %p59
        $region26: #{tpu_custom_call.1} parent=23 // pred_check_branch
          %206 = sbr.rel (%p204) target = $region28
        $region27: #{tpu_custom_call.1} parent=23 // pred_region
          %s207 = sand.u32 %s49, 1
          %s208 = scalar_lea.sflag [#allocation3], %s207
          %s209 = sand.u32 %s49, 1
          %s210 = smul.addr %s209, 16
          %s211 = scalar_lea.vmem [#allocation2], %s210
          %s212 = smul.u32 2, %s24
          %214 = vsyncadd %s208, 0
          %s215 = smul.addr %s25, 2
          %s216 = sadd.s32 %s212, %s215
          %s217 = smul.addr %s23, 4
          %s218 = sadd.s32 %s216, %s217
          %s219 = smul.addr %s218, 8
          %s220 = scalar_lea.hbm %s0, %s219
          %s221 = sshll.u32 %s220, 4
          %s222 = int_to_ptr.hbm [resolvable:$true] %s221
          %s223 = sshll.u32 %s211, 4
          %s224 = int_to_ptr.vmem [resolvable:$true] %s223
          %229 = dma.hbm_to_vmem [thread:$0]  %s222, 256, %s224, %s208, 128, 128, 8
        $region28: #{tpu_custom_call.1} parent=23 // pred_fallthru
          _
      $region24: #{tpu_custom_call.1} parent=5 // pred_fallthru
        _
      %p230 = scmp.le.s32.totalorder 1, %s16
      %p231 = scmp.lt.s32.totalorder %s16, 3
      %p232 = pnand %p230, %p231
      %p233 = pneg %p232
      // Predicated region
      $region29: #{tpu_custom_call.1} parent=5 // pred_check
        _
      $region30: #{tpu_custom_call.1} parent=5 // pred_check_branch
        %235 = sbr.rel (%p232) target = $region32
      $region31: #{tpu_custom_call.1} parent=5 // pred_region
        %s236 = ssub.s32 %s16, 1
        %s237 = sand.u32 %s52, 1
        %s238 = scalar_lea.sflag [#allocation3], %s237
        %s239 = sand.u32 %s52, 1
        %s240 = smul.addr %s239, 16
        %s241 = scalar_lea.vmem [#allocation2], %s240
        // Predicated region
        $region33: #{tpu_custom_call.1} parent=31 // pred_check
          %p242 = pneg %p65
        $region34: #{tpu_custom_call.1} parent=31 // pred_check_branch
          %244 = sbr.rel (%p242) target = $region36
        $region35: #{tpu_custom_call.1} parent=31 // pred_region
          %246 = dma.done %s238, 256
        $region36: #{tpu_custom_call.1} parent=31 // pred_fallthru
          _
        // Predicated region
        $region37: #{tpu_custom_call.1} parent=31 // pred_check
          %p247 = pneg %p91
        $region38: #{tpu_custom_call.1} parent=31 // pred_check_branch
          %249 = sbr.rel (%p247) target = $region40
        $region39: #{tpu_custom_call.1} parent=31 // pred_region
          %251 = dma.done [#allocation6], 256
        $region40: #{tpu_custom_call.1} parent=31 // pred_fallthru
          _
        // Predicated region
        $region41: #{tpu_custom_call.1} parent=31 // pred_check
          %p252 = pneg %p119
        $region42: #{tpu_custom_call.1} parent=31 // pred_check_branch
          %254 = sbr.rel (%p252) target = $region44
        $region43: #{tpu_custom_call.1} parent=31 // pred_region
          %256 = dma.done [#allocation6], 256
        $region44: #{tpu_custom_call.1} parent=31 // pred_fallthru
          _
        %s257 = sand.u32 %s52, 1
        %s258 = scalar_lea.sflag [#allocation3], %s257
        %s259 = sand.u32 %s52, 1
        %s260 = smul.addr %s259, 16
        %s261 = scalar_lea.vmem [#allocation2], %s260
        %p262 = pneg %p65
        %p263 = pneg %p62
        %p264 = pneg %p91
        %p265 = pneg %p88
        %p266 = pneg %p119
        %p267 = pneg %p116
        %p268 = pneg %p149
        %p269 = pneg %p146
        %s270 = sand.u32 %s136, 1
        %s271 = scalar_lea.sflag [#allocation4], %s270
        %s272 = sand.u32 %s136, 1
        %s273 = smul.addr %s272, 16
        %s274 = scalar_lea.vmem [#allocation8], %s273
        %s275 = smul.u32 2, %s27
        %s276 = smul.u32 2, %s27
        %s277 = smul.u32 2, %s27
        %v278 = vld [vmem:[%s241] sm:$0xff]
        %v279 = vld [vmem:[%s241 + $0x8] sm:$0xff]
        %v280 = vld [vmem:[#allocation5] sm:$0xff]
        %v281 = vld [vmem:[#allocation5 + $0x8] sm:$0xff]
        %v282 = vld [vmem:[#allocation7] sm:$0xff]
        %v283 = vld [vmem:[#allocation7 + $0x8] sm:$0xff]
        %vm284 = vcmask 130048
        %v286 = vsel %vm284, %v278, 0
        %v289 = vsel %vm284, %v279, 0
        %291 = vmatpush.msra.mxu0 0.0
        %292 = vmatpush.msra.mxu0 0.0
        %293 = vmatpush.msra.mxu0 0.0
        %294 = vmatpush.msra.mxu0 0.0
        %295 = vmatpush.msra.mxu0 0.0
        %296 = vmatpush.msra.mxu0 0.0
        %297 = vmatpush.msra.mxu0 0.0
        %298 = vmatpush.msra.mxu0 0.0
        %299 = vmatpush.msra.mxu0 0.0
        %300 = vmatpush.msra.mxu0 0.0
        %301 = vmatpush.msra.mxu0 0.0
        %302 = vmatpush.msra.mxu0 0.0
        %303 = vmatpush.msra.mxu0 0.0
        %304 = vmatpush.msra.mxu0 0.0
        %305 = vmatpush.msra.mxu0 %v281
        %306 = vmatpush.msra.mxu0 %v280
        %307 = vmatmul.f32.gmra.mxu0 %v286
        %v308 = vpop.f32.mrf.mxu0
        %v309 = vadd.f32 %v282, %v308
        %310 = vmatmul.f32.gmra.mxu0 %v289
        %v311 = vpop.f32.mrf.mxu0
        %v312 = vadd.f32 %v283, %v311
        %313 = vdwg.mxu0
        %314 = vst [vmem:[%s274] sm:$0xff] %v309
        %315 = vst [vmem:[%s274 + $0x8] sm:$0xff] %v312
        %s316 = sand.u32 %s136, 1
        %s317 = scalar_lea.sflag [#allocation4], %s316
        %s318 = sand.u32 %s136, 1
        %s319 = smul.addr %s318, 16
        %s320 = scalar_lea.vmem [#allocation8], %s319
        // Predicated region
        $region45: #{tpu_custom_call.1} parent=31 // pred_check
          %p321 = pneg %p146
        $region46: #{tpu_custom_call.1} parent=31 // pred_check_branch
          %323 = sbr.rel (%p321) target = $region48
        $region47: #{tpu_custom_call.1} parent=31 // pred_region
          %s324 = smul.u32 2, %s27
          %326 = vsyncadd %s317, 0
          %s327 = smul.addr %s28, 2
          %s328 = sadd.s32 %s324, %s327
          %s329 = smul.addr %s26, 4
          %s330 = sadd.s32 %s328, %s329
          %s331 = smul.addr %s330, 8
          %s332 = scalar_lea.hbm %s3, %s331
          %s333 = sshll.u32 %s320, 4
          %s334 = int_to_ptr.vmem [resolvable:$true] %s333
          %s335 = sshll.u32 %s332, 4
          %s336 = int_to_ptr.hbm [resolvable:$true] %s335
          %341 = dma.vmem_to_hbm [thread:$0]  %s334, 256, %s336, %s317, 128, 128, 8
        $region48: #{tpu_custom_call.1} parent=31 // pred_fallthru
          _
      $region32: #{tpu_custom_call.1} parent=5 // pred_fallthru
        _
      %p342 = scmp.le.s32.totalorder 2, %s16
      // Predicated region
      $region49: #{tpu_custom_call.1} parent=5 // pred_check
        %p343 = pneg %p342
      $region50: #{tpu_custom_call.1} parent=5 // pred_check_branch
        %345 = sbr.rel (%p343) target = $region52
      $region51: #{tpu_custom_call.1} parent=5 // pred_region
        %s346 = ssub.s32 %s16, 2
        // Predicated region
        $region53: #{tpu_custom_call.1} parent=51 // pred_check
          %p347 = pneg %p152
        $region54: #{tpu_custom_call.1} parent=51 // pred_check_branch
          %349 = sbr.rel (%p347) target = $region56
        $region55: #{tpu_custom_call.1} parent=51 // pred_region
          %s350 = sand.u32 %s137, 1
          %s351 = scalar_lea.sflag [#allocation4], %s350
          %s352 = sand.u32 %s137, 1
          %s353 = smul.addr %s352, 16
          %s354 = scalar_lea.vmem [#allocation8], %s353
          %356 = dma.done %s351, 256
        $region56: #{tpu_custom_call.1} parent=51 // pred_fallthru
          _
      $region52: #{tpu_custom_call.1} parent=5 // pred_fallthru
        _
    $region6: #{tpu_custom_call.1} parent=1 // loop_footer
      %s20 = sadd.s32 1, %s16
    $region7: #{tpu_custom_call.1} parent=1 // loop_footer_branch
      %15 = sbr.rel target = $region3
    $region8: #{tpu_custom_call.1} parent=1 // loop_exit
      _
    %357 = vsyncpa [#allocation3], 1
    %s358 = scalar_lea.sflag [#allocation3], 1
    %359 = vsyncpa %s358, 1
    %360 = vsyncpa [#allocation6], 1
    %361 = vsyncpa [#allocation4], 1
    %s362 = scalar_lea.sflag [#allocation4], 1
    %363 = vsyncpa %s362, 1

</llo_original>
